<compile_context>
chip_gen: v7x
topology: tpu7x:2x2x1
jax: 0.10.0
libtpu: 0.0.40
codegen_flags: <defaults>
</compile_context>

<pallas_src>
import functools

import jax
import jax.numpy as jnp
from jax.experimental import pallas as pl
from jax.experimental.pallas import tpu as pltpu


def _kl_div_kernel(x_ref, t_ref, o_ref, acc_ref, *,
                   inv_temp, total_rows, total_cols, t_b, t_hw,
                   mask_rows, mask_cols):
    bi = pl.program_id(0)                 # batch-tile index ("parallel")
    j = pl.program_id(1)                  # H*W-tile index ("arbitrary", reduction)

    @pl.when(j == 0)
    def _():
        acc_ref[...] = jnp.zeros_like(acc_ref)

    # (t_b, C, t_hw) tiles; softmax axis = channels = sublane axis (axis 1).
    x = x_ref[...].astype(jnp.float32)
    t = t_ref[...].astype(jnp.float32)
    if inv_temp != 1.0:                   # compile-time branch (Python float)
        x = x * inv_temp
        t = t * inv_temp

    x_shift = x - jnp.max(x, axis=1, keepdims=True)
    t_shift = t - jnp.max(t, axis=1, keepdims=True)
    t_exp = jnp.exp(t_shift)

    lse_x = jnp.log(jnp.sum(jnp.exp(x_shift), axis=1))        # (t_b, t_hw)
    t_sum = jnp.sum(t_exp, axis=1)                            # (t_b, t_hw)
    # sum_c p_t * (log p_t - log p_s)   using   sum_c p_t == 1
    num = jnp.sum(t_exp * (t_shift - x_shift), axis=1)        # (t_b, t_hw)
    kl = num / t_sum + (lse_x - jnp.log(t_sum))               # (t_b, t_hw)

    if mask_rows or mask_cols:
        # Ragged last tiles: padded rows/cols hold garbage (possibly Inf/NaN),
        # so select (do NOT multiply by zero, which would propagate NaN).
        valid = None
        if mask_cols:
            col = jax.lax.broadcasted_iota(jnp.int32, (t_b, t_hw), 1) + j * t_hw
            valid = col < total_cols
        if mask_rows:
            row = jax.lax.broadcasted_iota(jnp.int32, (t_b, t_hw), 0) + bi * t_b
            rvalid = row < total_rows
            valid = rvalid if valid is None else jnp.logical_and(valid, rvalid)
        kl = jnp.where(valid, kl, 0.0)

    # Pure elementwise accumulate each step; one cross-lane reduce at finalize.
    acc_ref[...] += kl

    @pl.when(j == pl.num_programs(1) - 1)
    def _():
        o_ref[...] = jnp.broadcast_to(jnp.sum(acc_ref[...]), (1, 1, 1))


def _vmem_plan():
    """(per-input block budget in f32 elems, vmem_limit_bytes), chip-aware."""
    # Conservative default targets v7x (64 MiB physical, shared VMEM).
    budget_bytes, vmem_limit = 2 * 1024 * 1024, 32 * 1024 * 1024
    try:
        cap = getattr(pltpu.get_tpu_info(), "vmem_capacity_bytes", None)
        if cap is not None and cap >= 128 * 1024 * 1024:
            # v5e / v6e: 128 MiB physical VMEM -> bigger blocks, higher limit.
            budget_bytes, vmem_limit = 4 * 1024 * 1024, 64 * 1024 * 1024
    except Exception:
        pass
    return budget_bytes // 4, vmem_limit


def _choose_tiles(B, C, hw, budget_elems, block_cols=None, block_rows=None):
    """Pick (t_b, t_hw): lane tile is a multiple of 128 (or the full extent);
    batch tile amortizes the per-grid-step fixed cost for small images."""
    if block_cols is not None:
        t_hw = hw if block_cols >= hw else max(128, (block_cols // 128) * 128)
    else:
        max_cols = max(budget_elems // max(C, 1), 128)
        max_cols = min(max_cols, 64 * 1024)      # bounds the (t_b, t_hw) scratch
        t_hw = hw if hw <= max_cols else (max_cols // 128) * 128

    if block_rows is not None:
        t_b = max(1, min(B, int(block_rows)))
    else:
        per_image_elems = max(C * t_hw, 1)
        t_b = max(1, min(B, budget_elems // per_image_elems))
        if B >= 2:
            # Keep >= 2 batch tiles so a 2-TensorCore chip (v7x) can split the
            # "parallel" axis; costs at most one extra grid step elsewhere.
            t_b = min(t_b, pl.cdiv(B, 2))
    return t_b, t_hw


def kl_divergence_loss(inputs, targets, temperature=1.0, *,
                       block_cols=None, block_rows=None):
    """inputs, targets: (B, C, H, W) arrays (NCHW, matching PyTorch)."""
    B, C, H, W = inputs.shape
    assert targets.shape == inputs.shape
    hw = H * W

    # Free layout change: NCHW -> (B, C, H*W).  No HBM transpose.
    x3 = inputs.reshape(B, C, hw)
    t3 = targets.reshape(B, C, hw)

    budget_elems, vmem_limit = _vmem_plan()
    t_b, t_hw = _choose_tiles(B, C, hw, budget_elems, block_cols, block_rows)
    n_b = pl.cdiv(B, t_b)
    n_hw = pl.cdiv(hw, t_hw)

    # F.kl_div(reduction='mean') divides by B*C*H*W; module multiplies by T^2*C.
    scale = (float(temperature) ** 2) * C / float(B * C * hw)

    kernel = functools.partial(
        _kl_div_kernel,
        inv_temp=1.0 / float(temperature),
        total_rows=B, total_cols=hw, t_b=t_b, t_hw=t_hw,
        mask_rows=(B % t_b) != 0,
        mask_cols=(hw % t_hw) != 0,
    )

    partials = pl.pallas_call(
        kernel,
        out_shape=jax.ShapeDtypeStruct((n_b, 1, 1), jnp.float32),
        grid=(n_b, n_hw),
        in_specs=[
            pl.BlockSpec((t_b, C, t_hw), lambda bi, j: (bi, 0, j)),
            pl.BlockSpec((t_b, C, t_hw), lambda bi, j: (bi, 0, j)),
        ],
        # One partial per batch tile so the "parallel" axis can shard across
        # TensorCores without output/accumulator races.
        out_specs=pl.BlockSpec((1, 1, 1), lambda bi, j: (bi, 0, 0)),
        scratch_shapes=[pltpu.VMEM((t_b, t_hw), jnp.float32)],
        compiler_params=pltpu.CompilerParams(
            dimension_semantics=("parallel", "arbitrary"),
            vmem_limit_bytes=vmem_limit,
        ),
    )(x3, t3)

    return jnp.sum(partials[:, 0, 0]) * jnp.float32(scale)


def _reference(inputs, targets, temperature=1.0):
    C = inputs.shape[1]
    x = inputs.astype(jnp.float32) / temperature
    t = targets.astype(jnp.float32) / temperature
    log_p_s = jax.nn.log_softmax(x, axis=1)
    p_t = jax.nn.softmax(t, axis=1)
    log_p_t = jax.nn.log_softmax(t, axis=1)
    pointwise = p_t * (log_p_t - log_p_s)
    return jnp.mean(pointwise) * (temperature ** 2) * C


if __name__ == "__main__":
    key = jax.random.PRNGKey(0)
    k1, k2, k3, k4, k5, k6 = jax.random.split(key, 6)
    temperature = 2.0

    # Case 1: canonical small NCHW shape, f32, single lane tile.
    B, C, H, W = 2, 4, 16, 16
    x = jax.random.normal(k1, (B, C, H, W), dtype=jnp.float32)
    t = jax.random.normal(k2, (B, C, H, W), dtype=jnp.float32)
    loss = kl_divergence_loss(x, t, temperature)
    jax.block_until_ready(loss)
    ref = _reference(x, t, temperature)
    assert jnp.allclose(loss, ref, rtol=1e-5, atol=1e-6), (loss, ref)

    # Case 2: multiple lane tiles + ragged last H*W tile (column mask path).
    B2, C2, H2, W2 = 2, 4, 16, 20          # H*W = 320, tiles of 128
    x2 = jax.random.normal(k3, (B2, C2, H2, W2), dtype=jnp.float32)
    t2 = jax.random.normal(k4, (B2, C2, H2, W2), dtype=jnp.float32)
    loss2 = kl_divergence_loss(x2, t2, temperature, block_cols=128)
    jax.block_until_ready(loss2)
    ref2 = _reference(x2, t2, temperature)
    assert jnp.allclose(loss2, ref2, rtol=1e-5, atol=1e-6), (loss2, ref2)

    # Case 3: bf16 inputs streamed directly (f32 cast happens in-kernel).
    xb = x.astype(jnp.bfloat16)
    tb = t.astype(jnp.bfloat16)
    loss3 = kl_divergence_loss(xb, tb, temperature)
    jax.block_until_ready(loss3)
    ref3 = _reference(xb.astype(jnp.float32), tb.astype(jnp.float32), temperature)
    assert jnp.allclose(loss3, ref3, rtol=1e-5, atol=1e-5), (loss3, ref3)

    # Case 4: small images -> batch blocking (t_b=2) with ragged batch tile
    # (row mask path): B=3 splits into batch tiles of 2 + 1.
    B4, C4, H4, W4 = 3, 4, 8, 8
    x4 = jax.random.normal(k5, (B4, C4, H4, W4), dtype=jnp.float32)
    t4 = jax.random.normal(k6, (B4, C4, H4, W4), dtype=jnp.float32)
    loss4 = kl_divergence_loss(x4, t4, temperature)
    jax.block_until_ready(loss4)
    ref4 = _reference(x4, t4, temperature)
    assert jnp.allclose(loss4, ref4, rtol=1e-5, atol=1e-6), (loss4, ref4)

    # Case 5: temperature == 1.0 (compile-time skip of the input scaling).
    loss5 = kl_divergence_loss(x, t, 1.0)
    jax.block_until_ready(loss5)
    ref5 = _reference(x, t, 1.0)
    assert jnp.allclose(loss5, ref5, rtol=1e-5, atol=1e-6), (loss5, ref5)

    print("KERNEL_OK")
</pallas_src>

<mosaic_0001>
module attributes {stable_mosaic.version = 11 : i64} {
  func.func @_kl_div_kernel(%arg0: i32, %arg1: i32, %arg2: memref<1x4x256xf32, #tpu.memory_space<vmem>>, %arg3: memref<1x4x256xf32, #tpu.memory_space<vmem>>, %arg4: memref<1x1x1xf32, #tpu.memory_space<vmem>>, %arg5: memref<1x256xf32, #tpu.memory_space<vmem>>) attributes {dimension_semantics = [#tpu.dimension_semantics<parallel>, #tpu.dimension_semantics<arbitrary>], iteration_bounds = array<i64: 2, 1>, scalar_prefetch = 0 : i64, scratch_operands = 1 : i64, tpu.core_type = #tpu.core_type<tc>, window_params = [{transform_indices = @transform_0, window_bounds = array<i64: 1, 4, 256>}, {transform_indices = @transform_1, window_bounds = array<i64: 1, 4, 256>}, {transform_indices = @transform_2, window_bounds = array<i64: 1, 1, 1>}]} {
    %c0_i32 = arith.constant 0 : i32
    %0 = arith.cmpi eq, %arg1, %c0_i32 : i32
    %1 = arith.extui %0 : i1 to i32
    %c0_i32_0 = arith.constant 0 : i32
    %2 = arith.cmpi ne, %1, %c0_i32_0 : i32
    scf.if %2 {
      %cst_18 = arith.constant 0.000000e+00 : f32
      %35 = vector.broadcast %cst_18 : f32 to vector<1x256xf32>
      %c0_19 = arith.constant 0 : index
      %c0_20 = arith.constant 0 : index
      %36 = vector.load %arg5[%c0_19, %c0_20] : memref<1x256xf32, #tpu.memory_space<vmem>>, vector<1x256xf32>
      tpu.vector_store %arg5[%c0_19, %c0_20], %35 {strides = array<i32>} : memref<1x256xf32, #tpu.memory_space<vmem>>, vector<1x256xf32>,
    } else {
    }
    %c0 = arith.constant 0 : index
    %c0_1 = arith.constant 0 : index
    %c0_2 = arith.constant 0 : index
    %3 = vector.load %arg2[%c0, %c0_1, %c0_2] : memref<1x4x256xf32, #tpu.memory_space<vmem>>, vector<1x4x256xf32>
    %c0_3 = arith.constant 0 : index
    %c0_4 = arith.constant 0 : index
    %c0_5 = arith.constant 0 : index
    %4 = vector.load %arg3[%c0_3, %c0_4, %c0_5] : memref<1x4x256xf32, #tpu.memory_space<vmem>>, vector<1x4x256xf32>
    %cst = arith.constant 5.000000e-01 : f32
    %5 = vector.broadcast %cst : f32 to vector<1x4x256xf32>
    %6 = arith.mulf %3, %5 : vector<1x4x256xf32>
    %cst_6 = arith.constant 5.000000e-01 : f32
    %7 = vector.broadcast %cst_6 : f32 to vector<1x4x256xf32>
    %8 = arith.mulf %4, %7 : vector<1x4x256xf32>
    %cst_7 = arith.constant dense<0xFF800000> : vector<1x256xf32>
    %9 = vector.multi_reduction <maximumf>, %6, %cst_7 [1] : vector<1x4x256xf32> to vector<1x256xf32>
    %10 = vector.shape_cast %9 : vector<1x256xf32> to vector<1x1x256xf32>
    %11 = vector.broadcast %10 : vector<1x1x256xf32> to vector<1x4x256xf32>
    %12 = arith.subf %6, %11 : vector<1x4x256xf32>
    %cst_8 = arith.constant dense<0xFF800000> : vector<1x256xf32>
    %13 = vector.multi_reduction <maximumf>, %8, %cst_8 [1] : vector<1x4x256xf32> to vector<1x256xf32>
    %14 = vector.shape_cast %13 : vector<1x256xf32> to vector<1x1x256xf32>
    %15 = vector.broadcast %14 : vector<1x1x256xf32> to vector<1x4x256xf32>
    %16 = arith.subf %8, %15 : vector<1x4x256xf32>
    %17 = math.exp %16 : vector<1x4x256xf32>
    %18 = math.exp %12 : vector<1x4x256xf32>
    %cst_9 = arith.constant dense<0.000000e+00> : vector<1x256xf32>
    %19 = vector.multi_reduction <add>, %18, %cst_9 [1] : vector<1x4x256xf32> to vector<1x256xf32>
    %20 = math.log %19 : vector<1x256xf32>
    %cst_10 = arith.constant dense<0.000000e+00> : vector<1x256xf32>
    %21 = vector.multi_reduction <add>, %17, %cst_10 [1] : vector<1x4x256xf32> to vector<1x256xf32>
    %22 = arith.subf %16, %12 : vector<1x4x256xf32>
    %23 = arith.mulf %17, %22 : vector<1x4x256xf32>
    %cst_11 = arith.constant dense<0.000000e+00> : vector<1x256xf32>
    %24 = vector.multi_reduction <add>, %23, %cst_11 [1] : vector<1x4x256xf32> to vector<1x256xf32>
    %25 = arith.divf %24, %21 : vector<1x256xf32>
    %26 = math.log %21 : vector<1x256xf32>
    %27 = arith.subf %20, %26 : vector<1x256xf32>
    %28 = arith.addf %25, %27 : vector<1x256xf32>
    %c0_12 = arith.constant 0 : index
    %c0_13 = arith.constant 0 : index
    %29 = vector.load %arg5[%c0_12, %c0_13] : memref<1x256xf32, #tpu.memory_space<vmem>>, vector<1x256xf32>
    %30 = arith.addf %29, %28 : vector<1x256xf32>
    %c0_14 = arith.constant 0 : index
    %c0_15 = arith.constant 0 : index
    %31 = vector.load %arg5[%c0_14, %c0_15] : memref<1x256xf32, #tpu.memory_space<vmem>>, vector<1x256xf32>
    tpu.vector_store %arg5[%c0_14, %c0_15], %30 {strides = array<i32>} : memref<1x256xf32, #tpu.memory_space<vmem>>, vector<1x256xf32>,
    %c0_i32_16 = arith.constant 0 : i32
    %32 = arith.cmpi eq, %arg1, %c0_i32_16 : i32
    %33 = arith.extui %32 : i1 to i32
    %c0_i32_17 = arith.constant 0 : i32
    %34 = arith.cmpi ne, %33, %c0_i32_17 : i32
    scf.if %34 {
      %c0_18 = arith.constant 0 : index
      %c0_19 = arith.constant 0 : index
      %35 = vector.load %arg5[%c0_18, %c0_19] : memref<1x256xf32, #tpu.memory_space<vmem>>, vector<1x256xf32>
      %36 = vector.shape_cast %35 : vector<1x256xf32> to vector<1x1x256xf32>
      %cst_20 = arith.constant dense<0.000000e+00> : vector<1xf32>
      %37 = vector.multi_reduction <add>, %36, %cst_20 [1, 2] : vector<1x1x256xf32> to vector<1xf32>
      %38 = vector.shape_cast %37 : vector<1xf32> to vector<1x1x1xf32>
      %39 = vector.extract %38[0, 0, 0] : f32 from vector<1x1x1xf32>
      %40 = vector.broadcast %39 : f32 to vector<1x1x1xf32>
      %c0_21 = arith.constant 0 : index
      %c0_22 = arith.constant 0 : index
      %c0_23 = arith.constant 0 : index
      %41 = vector.load %arg4[%c0_21, %c0_22, %c0_23] : memref<1x1x1xf32, #tpu.memory_space<vmem>>, vector<1x1x1xf32>
      tpu.vector_store %arg4[%c0_21, %c0_22, %c0_23], %40 {strides = array<i32>} : memref<1x1x1xf32, #tpu.memory_space<vmem>>, vector<1x1x1xf32>,
    } else {
    }
    return
  }
  func.func @transform_0(%arg0: i32, %arg1: i32) -> (i32, i32, i32) {
    %c0_i32 = arith.constant 0 : i32
    %c0_i32_0 = arith.constant 0 : i32
    return %arg0, %c0_i32, %arg1 : i32, i32, i32
  }
  func.func @transform_1(%arg0: i32, %arg1: i32) -> (i32, i32, i32) {
    %c0_i32 = arith.constant 0 : i32
    %c0_i32_0 = arith.constant 0 : i32
    return %arg0, %c0_i32, %arg1 : i32, i32, i32
  }
  func.func @transform_2(%arg0: i32, %arg1: i32) -> (i32, i32, i32) {
    %c0_i32 = arith.constant 0 : i32
    %c0_i32_0 = arith.constant 0 : i32
    %c0_i32_1 = arith.constant 0 : i32
    return %arg0, %c0_i32, %c0_i32_0 : i32, i32, i32
  }
}

</mosaic_0001>

<llo_original>
// kernel: tpu_custom_call.1
$region0: #{tpu_custom_call.1}
  #allocation0 [shape = 'u32[]', space=smem, size = 0x4, offset = 0x4, fixed_abs, tag = 'smem constant byte address 0x4 - core index']
  #allocation1 [shape = 'u32[144,128]{1,0:T(1,128)}', space=vmem, size = 0x12000, scoped, tag = 'internal scratch']
  #allocation2 [shape = 'f32[1,256]{1,0:T(1,128)}', space=vmem, size = 0x400, scoped, tag = 'scratch operand']
  %s0 = inlined_call_operand.hbm [shape: f32[2,4,256], index: 0, kind: input, shape index: {}]
  %s1 = inlined_call_operand.hbm [shape: f32[2,4,256], index: 1, kind: input, shape index: {}]
  %s2 = inlined_call_operand.vmem [shape: f32[2,1,1], index: 2, kind: output, shape index: {}]
  %s3 = sld [smem:[#allocation0]]
  $region57: #{tpu_custom_call.1} parent=0
    _
  %s5 = ssub.s32 1, %s3
  %s6 = scalar_select 0, %s5, %s3
  $region1: #{tpu_custom_call.1} parent=0
    #allocation3 [shape = 'u8[8192]{0}', space=vmem, size = 0x2000, scoped, tag = 'input window, operand 0']
    #allocation4 [shape = 's32[2]{0}', space=sflag, size = 0x8, scoped, tag = 'scoped memory for tpu_custom_call.1']
    #allocation5 [shape = 'u8[8192]{0}', space=vmem, size = 0x2000, scoped, tag = 'input window, operand 1']
    #allocation6 [shape = 's32[2]{0}', space=sflag, size = 0x8, scoped, tag = 'scoped memory for tpu_custom_call.1']
    %7 = vsyncpa [#allocation4], 0
    %s8 = scalar_lea.sflag [#allocation4], 1
    %9 = vsyncpa %s8, 0
    %10 = vsyncpa [#allocation6], 0
    %s11 = scalar_lea.sflag [#allocation6], 1
    %12 = vsyncpa %s11, 0
    loop: start=0, step=1, limit=4
    $region2: #{tpu_custom_call.1} parent=1 // loop_pre_header
      _
    $region3: #{tpu_custom_call.1} parent=1 // loop_header
      %s14 = sphi 0, %s18
      %p15 = scmp.ge.s32.totalorder %s14, 4
      %s21 = sphi 0, %s33
      %s22 = sphi 0, %s29
      %s23 = sphi 0, %s21
      %s24 = sphi 0, %s22
      %s25 = sphi 0, %s23
      %s26 = sphi 0, %s24
      %s38 = sphi 0, %s40
      %s41 = sphi 0, %s38
      %s42 = sphi 0, %s41
      %s58 = sphi 0, %s42
      %s66 = sphi 0, %s68
      %s69 = sphi 0, %s66
      %s70 = sphi 0, %s69
      %s86 = sphi 0, %s70
      %s92 = sphi 0, %s94
      %s95 = sphi 0, %s92
      %s96 = sphi 0, %s95
      %s112 = sphi 0, %s96
    $region4: #{tpu_custom_call.1} parent=1 // loop_header_branch
      %17 = sbr.rel (%p15) target = $region8
    $region5: #{tpu_custom_call.1} parent=1 // loop_body
      %s19 = ssub.s32 %s14, 1
      %s20 = ssub.s32 %s14, 2
      %s27 = sadd.s32 1, %s22
      %p28 = scmp.ge.s32.totalorder %s27, 1
      %s29 = scalar_select %p28, 0, %s27
      %s30 = sadd.s32 1, %s21
      %s31 = scalar_select %p28, %s30, %s21
      %p32 = scmp.ge.s32.totalorder %s31, 2
      %s33 = scalar_select %p32, 0, %s31
      %s34 = ssub.s32 %s21, %s33
      %s35 = ssub.s32 %s22, %s29
      %s36 = sor.u32 %s34, %s35
      %p37 = scmp.eq.s32.totalorder %s36, 0
      %s39 = sadd.s32 %s38, 1
      %s40 = scalar_select %p37, %s38, %s39
      %p43 = pneg %p37
      %p44 = scmp.eq.s32.totalorder %s14, 1
      %p45 = por %p43, %p44
      %p46 = scmp.ne.s32.totalorder %s38, %s41
      %p47 = scmp.eq.s32.totalorder %s14, 0
      %p48 = por %p46, %p47
      %p49 = scmp.ne.s32.totalorder %s38, %s41
      %p50 = scmp.eq.s32.totalorder %s19, 1
      %p51 = por %p49, %p50
      %p52 = scmp.ne.s32.totalorder %s41, %s42
      %p53 = scmp.eq.s32.totalorder %s19, 0
      %p54 = por %p52, %p53
      %p55 = scmp.ne.s32.totalorder %s41, %s42
      %p56 = scmp.eq.s32.totalorder %s20, 1
      %p57 = por %p55, %p56
      %p59 = scmp.ne.s32.totalorder %s42, %s58
      %p60 = scmp.eq.s32.totalorder %s20, 0
      %p61 = por %p59, %p60
      %s62 = ssub.s32 %s21, %s33
      %s63 = ssub.s32 %s22, %s29
      %s64 = sor.u32 %s62, %s63
      %p65 = scmp.eq.s32.totalorder %s64, 0
      %s67 = sadd.s32 %s66, 1
      %s68 = scalar_select %p65, %s66, %s67
      %p71 = pneg %p65
      %p72 = scmp.eq.s32.totalorder %s14, 1
      %p73 = por %p71, %p72
      %p74 = scmp.ne.s32.totalorder %s66, %s69
      %p75 = scmp.eq.s32.totalorder %s14, 0
      %p76 = por %p74, %p75
      %p77 = scmp.ne.s32.totalorder %s66, %s69
      %p78 = scmp.eq.s32.totalorder %s19, 1
      %p79 = por %p77, %p78
      %p80 = scmp.ne.s32.totalorder %s69, %s70
      %p81 = scmp.eq.s32.totalorder %s19, 0
      %p82 = por %p80, %p81
      %p83 = scmp.ne.s32.totalorder %s69, %s70
      %p84 = scmp.eq.s32.totalorder %s20, 1
      %p85 = por %p83, %p84
      %p87 = scmp.ne.s32.totalorder %s70, %s86
      %p88 = scmp.eq.s32.totalorder %s20, 0
      %p89 = por %p87, %p88
      %s90 = ssub.s32 %s21, %s33
      %p91 = scmp.eq.s32.totalorder %s90, 0
      %s93 = sadd.s32 %s92, 1
      %s94 = scalar_select %p91, %s92, %s93
      %p97 = pneg %p91
      %p98 = scmp.eq.s32.totalorder %s14, 1
      %p99 = por %p97, %p98
      %p100 = scmp.ne.s32.totalorder %s92, %s95
      %p101 = scmp.eq.s32.totalorder %s14, 0
      %p102 = por %p100, %p101
      %p103 = scmp.ne.s32.totalorder %s92, %s95
      %p104 = scmp.eq.s32.totalorder %s19, 1
      %p105 = por %p103, %p104
      %p106 = scmp.ne.s32.totalorder %s95, %s96
      %p107 = scmp.eq.s32.totalorder %s19, 0
      %p108 = por %p106, %p107
      %p109 = scmp.ne.s32.totalorder %s95, %s96
      %p110 = scmp.eq.s32.totalorder %s20, 1
      %p111 = por %p109, %p110
      %p113 = scmp.ne.s32.totalorder %s96, %s112
      %p114 = scmp.eq.s32.totalorder %s20, 0
      %p115 = por %p113, %p114
      %p116 = scmp.le.s32.totalorder 1, %s14
      %p117 = scmp.lt.s32.totalorder %s14, 3
      %p118 = pnand %p116, %p117
      %p119 = pneg %p118
      // Predicated region
      $region9: #{tpu_custom_call.1} parent=5 // pred_check
        _
      $region10: #{tpu_custom_call.1} parent=5 // pred_check_branch
        %121 = sbr.rel (%p118) target = $region12
      $region11: #{tpu_custom_call.1} parent=5 // pred_region
        %s122 = ssub.s32 %s14, 1
      $region12: #{tpu_custom_call.1} parent=5 // pred_fallthru
        _
      %p123 = scmp.lt.s32.totalorder %s14, 2
      // Predicated region
      $region13: #{tpu_custom_call.1} parent=5 // pred_check
        %p124 = pneg %p123
      $region14: #{tpu_custom_call.1} parent=5 // pred_check_branch
        %126 = sbr.rel (%p124) target = $region16
      $region15: #{tpu_custom_call.1} parent=5 // pred_region
        // Predicated region
        $region17: #{tpu_custom_call.1} parent=15 // pred_check
          %p127 = pneg %p48
        $region18: #{tpu_custom_call.1} parent=15 // pred_check_branch
          %129 = sbr.rel (%p127) target = $region20
        $region19: #{tpu_custom_call.1} parent=15 // pred_region
          %s130 = sand.u32 %s38, 1
          %s131 = scalar_lea.sflag [#allocation4], %s130
          %s132 = sand.u32 %s38, 1
          %s133 = smul.addr %s132, 8
          %s134 = scalar_lea.vmem [#allocation3], %s133
          %s135 = smul.u32 2, %s22
          %s137 = ssub.s32 128, 128
          %138 = vsyncadd %s131, %s137
          %s139 = smul.addr %s21, 2
          %s140 = sadd.s32 %s135, %s139
          %s141 = smul.addr %s140, 64
          %s142 = scalar_lea.hbm %s0, %s141
          %s144 = sshll.u32 %s134, 4
          %s145 = int_to_ptr.vmem [resolvable:$true] %s144
          %147 = dma.hbm_to_vmem [thread:$0]  %s142, 128, %s145, %s131
        $region20: #{tpu_custom_call.1} parent=15 // pred_fallthru
          _
        // Predicated region
        $region21: #{tpu_custom_call.1} parent=15 // pred_check
          %p148 = pneg %p76
        $region22: #{tpu_custom_call.1} parent=15 // pred_check_branch
          %150 = sbr.rel (%p148) target = $region24
        $region23: #{tpu_custom_call.1} parent=15 // pred_region
          %s151 = sand.u32 %s66, 1
          %s152 = scalar_lea.sflag [#allocation6], %s151
          %s153 = sand.u32 %s66, 1
          %s154 = smul.addr %s153, 8
          %s155 = scalar_lea.vmem [#allocation5], %s154
          %s156 = smul.u32 2, %s22
          %s158 = ssub.s32 128, 128
          %159 = vsyncadd %s152, %s158
          %s160 = smul.addr %s21, 2
          %s161 = sadd.s32 %s156, %s160
          %s162 = smul.addr %s161, 64
          %s163 = scalar_lea.hbm %s1, %s162
          %s165 = sshll.u32 %s155, 4
          %s166 = int_to_ptr.vmem [resolvable:$true] %s165
          %168 = dma.hbm_to_vmem [thread:$0]  %s163, 128, %s166, %s152
        $region24: #{tpu_custom_call.1} parent=15 // pred_fallthru
          _
      $region16: #{tpu_custom_call.1} parent=5 // pred_fallthru
        _
      %p169 = scmp.le.s32.totalorder 1, %s14
      %p170 = scmp.lt.s32.totalorder %s14, 3
      %p171 = pnand %p169, %p170
      %p172 = pneg %p171
      // Predicated region
      $region25: #{tpu_custom_call.1} parent=5 // pred_check
        _
      $region26: #{tpu_custom_call.1} parent=5 // pred_check_branch
        %174 = sbr.rel (%p171) target = $region28
      $region27: #{tpu_custom_call.1} parent=5 // pred_region
        %s175 = ssub.s32 %s14, 1
        %s176 = sand.u32 %s41, 1
        %s177 = scalar_lea.sflag [#allocation4], %s176
        %s178 = sand.u32 %s41, 1
        %s179 = smul.addr %s178, 8
        %s180 = scalar_lea.vmem [#allocation3], %s179
        // Predicated region
        $region29: #{tpu_custom_call.1} parent=27 // pred_check
          %p181 = pneg %p54
        $region30: #{tpu_custom_call.1} parent=27 // pred_check_branch
          %183 = sbr.rel (%p181) target = $region32
        $region31: #{tpu_custom_call.1} parent=27 // pred_region
          %184 = dma.done %s177, 128
        $region32: #{tpu_custom_call.1} parent=27 // pred_fallthru
          _
        %s185 = sand.u32 %s69, 1
        %s186 = scalar_lea.sflag [#allocation6], %s185
        %s187 = sand.u32 %s69, 1
        %s188 = smul.addr %s187, 8
        %s189 = scalar_lea.vmem [#allocation5], %s188
        // Predicated region
        $region33: #{tpu_custom_call.1} parent=27 // pred_check
          %p190 = pneg %p82
        $region34: #{tpu_custom_call.1} parent=27 // pred_check_branch
          %192 = sbr.rel (%p190) target = $region36
        $region35: #{tpu_custom_call.1} parent=27 // pred_region
          %193 = dma.done %s186, 128
        $region36: #{tpu_custom_call.1} parent=27 // pred_fallthru
          _
        %s194 = sand.u32 %s41, 1
        %s195 = scalar_lea.sflag [#allocation4], %s194
        %s196 = sand.u32 %s41, 1
        %s197 = smul.addr %s196, 8
        %s198 = scalar_lea.vmem [#allocation3], %s197
        %p199 = pneg %p54
        %p200 = pneg %p51
        %s201 = sand.u32 %s69, 1
        %s202 = scalar_lea.sflag [#allocation6], %s201
        %s203 = sand.u32 %s69, 1
        %s204 = smul.addr %s203, 8
        %s205 = scalar_lea.vmem [#allocation5], %s204
        %p206 = pneg %p82
        %p207 = pneg %p79
        %p208 = pneg %p108
        %p209 = pneg %p105
        %p210 = scmp.lt.s32.totalorder %s23, 1
        %s211 = scalar_select %p210, %s23, 1
        %s212 = scalar_lea.vmem %s2, %s211
        %s213 = smul.u32 2, %s24
        %s214 = smul.u32 2, %s24
        %p215 = scmp.lt.s32.totalorder %s23, 1
        %s216 = scalar_select %p215, %s23, 1
        %s217 = scalar_lea.vmem %s2, %s216
        %p218 = scmp.eq.s32.totalorder %s24, 0
        // Predicated region
        $region37: #{tpu_custom_call.1} parent=27 // pred_check
          %p219 = pneg %p218
        $region38: #{tpu_custom_call.1} parent=27 // pred_check_branch
          %221 = sbr.rel (%p219) target = $region40
        $region39: #{tpu_custom_call.1} parent=27 // pred_region
          %v222 = vlaneseq
          %vm223 = vcmp.ge.s32.totalorder %v222, 0
          %vm224 = vcmp.lt.s32.totalorder %v222, 256
          %vm225 = vmand %vm223, %vm224
          %226 = vst.msk [vmem:[#allocation2] sm:$0x3] %vm225, 0.0
        $region40: #{tpu_custom_call.1} parent=27 // pred_fallthru
          _
        %v227 = vld [vmem:[%s180] sm:$0xff]
        %v228 = vld [vmem:[%s189] sm:$0xff]
        %v229 = vmul.f32 %v227, 0.5
        %v230 = vmul.f32 %v228, 0.5
        %v232 = vcombine.high %v229, %v229
        %vm234 = vcmask 1043456
        %v235 = vsel %vm234, %v229, -inf
        %v236 = vrot.slane %v235, 4
        %v237 = vmax.f32 %v235, %v236
        %v238 = vrot.slane %v237, 2
        %v239 = vmax.f32 %v237, %v238
        %v240 = vrot.slane %v239, 1
        %v241 = vmax.f32 %v239, %v240
        %v242 = vsel %vm234, %v232, -inf
        %v243 = vrot.slane %v242, 4
        %v244 = vmax.f32 %v242, %v243
        %v245 = vrot.slane %v244, 2
        %v246 = vmax.f32 %v244, %v245
        %v247 = vrot.slane %v246, 1
        %v248 = vmax.f32 %v246, %v247
        %v251 = vcombine.low %v241, %v248
        %v253 = vsub.f32 %v229, %v251
        %v255 = vcombine.high %v230, %v230
        %v257 = vsel %vm234, %v230, -inf
        %v258 = vrot.slane %v257, 4
        %v259 = vmax.f32 %v257, %v258
        %v260 = vrot.slane %v259, 2
        %v261 = vmax.f32 %v259, %v260
        %v262 = vrot.slane %v261, 1
        %v263 = vmax.f32 %v261, %v262
        %v264 = vsel %vm234, %v255, -inf
        %v265 = vrot.slane %v264, 4
        %v266 = vmax.f32 %v264, %v265
        %v267 = vrot.slane %v266, 2
        %v268 = vmax.f32 %v266, %v267
        %v269 = vrot.slane %v268, 1
        %v270 = vmax.f32 %v268, %v269
        %v273 = vcombine.low %v263, %v270
        %v275 = vsub.f32 %v230, %v273
        %v276 = vmul.f32 %v275, 1.442695
        %v277 = vpow.pop %v276
        %v278 = vmul.f32 %v253, 1.442695
        %v279 = vpow.pop %v278
        %v281 = vcombine.high %v279, %v279
        %v283 = vsel %vm234, %v279, 0.0
        %v284 = vrot.slane %v283, 4
        %v285 = vadd.f32 %v283, %v284
        %v286 = vrot.slane %v285, 2
        %v287 = vadd.f32 %v285, %v286
        %v288 = vrot.slane %v287, 1
        %v289 = vadd.f32 %v287, %v288
        %v290 = vsel %vm234, %v281, 0.0
        %v291 = vrot.slane %v290, 4
        %v292 = vadd.f32 %v290, %v291
        %v293 = vrot.slane %v292, 2
        %v294 = vadd.f32 %v292, %v293
        %v295 = vrot.slane %v294, 1
        %v296 = vadd.f32 %v294, %v295
        %v297 = vlog2.pop %v289
        %v298 = vmul.f32 %v297, 0.6931472
        %v299 = vlog2.pop %v296
        %v300 = vmul.f32 %v299, 0.6931472
        %v302 = vcombine.high %v277, %v277
        %v304 = vsel %vm234, %v277, 0.0
        %v305 = vrot.slane %v304, 4
        %v306 = vadd.f32 %v304, %v305
        %v307 = vrot.slane %v306, 2
        %v308 = vadd.f32 %v306, %v307
        %v309 = vrot.slane %v308, 1
        %v310 = vadd.f32 %v308, %v309
        %v311 = vsel %vm234, %v302, 0.0
        %v312 = vrot.slane %v311, 4
        %v313 = vadd.f32 %v311, %v312
        %v314 = vrot.slane %v313, 2
        %v315 = vadd.f32 %v313, %v314
        %v316 = vrot.slane %v315, 1
        %v317 = vadd.f32 %v315, %v316
        %v318 = vsub.f32 %v275, %v253
        %v319 = vmul.f32 %v277, %v318
        %v321 = vcombine.high %v319, %v319
        %v323 = vsel %vm234, %v319, 0.0
        %v324 = vrot.slane %v323, 4
        %v325 = vadd.f32 %v323, %v324
        %v326 = vrot.slane %v325, 2
        %v327 = vadd.f32 %v325, %v326
        %v328 = vrot.slane %v327, 1
        %v329 = vadd.f32 %v327, %v328
        %v330 = vsel %vm234, %v321, 0.0
        %v331 = vrot.slane %v330, 4
        %v332 = vadd.f32 %v330, %v331
        %v333 = vrot.slane %v332, 2
        %v334 = vadd.f32 %v332, %v333
        %v335 = vrot.slane %v334, 1
        %v336 = vadd.f32 %v334, %v335
        %v337 = vrcp.pop %v310
        %v338 = vmul.f32 %v329, %v337
        %v339 = vrcp.pop %v317
        %v340 = vmul.f32 %v336, %v339
        %v341 = vlog2.pop %v310
        %v342 = vmul.f32 %v341, 0.6931472
        %v343 = vlog2.pop %v317
        %v344 = vmul.f32 %v343, 0.6931472
        %v345 = vsub.f32 %v298, %v342
        %v346 = vsub.f32 %v300, %v344
        %v347 = vadd.f32 %v338, %v345
        %v348 = vadd.f32 %v340, %v346
        %v349 = vld [vmem:[#allocation2] sm:$0x3]
        %v352 = vcombine.low %v347, %v348
        %v354 = vunpack.c.l.s4 1966171168
        %v355 = vunpack.c.0.s8 %v354
        %v356 = vlaneseq
        %v357 = vshrl.u32 %v356, 7
        %v358 = vsub.s32 %v355, %v357
        %v359 = vrot.slane %v352, %v358
        %v361 = vunpack.c.l.s4 1966171168
        %v362 = vunpack.c.0.s8 %v361
        %v363 = vlaneseq
        %v364 = vshrl.u32 %v363, 7
        %v365 = vsub.s32 %v362, %v364
        %v366 = vrot.slane %v359, %v365
        %v368 = vadd.f32 %v349, %v366
        %v369 = vlaneseq
        %vm370 = vcmp.ge.s32.totalorder %v369, 0
        %vm371 = vcmp.lt.s32.totalorder %v369, 256
        %vm372 = vmand %vm370, %vm371
        %373 = vst.msk [vmem:[#allocation2] sm:$0x3] %vm372, %v368
        // Predicated region
        $region41: #{tpu_custom_call.1} parent=27 // pred_check
          %p374 = pneg %p218
        $region42: #{tpu_custom_call.1} parent=27 // pred_check_branch
          %376 = sbr.rel (%p374) target = $region44
        $region43: #{tpu_custom_call.1} parent=27 // pred_region
          %v377 = vld [vmem:[#allocation2] sm:$0x3]
          %v379 = vlaneseq
          %v380 = vshrl.u32 %v379, 7
          %v381 = vsub.s32 0, %v380
          %v382 = vrot.slane %v377, %v381
          %v383 = vlaneseq
          %v384 = vshrl.u32 %v383, 7
          %v385 = vsub.s32 1, %v384
          %v386 = vrot.slane %v377, %v385
          %vm389 = vcmask 1040384
          %v390 = vsel %vm389, %v382, 0.0
          %v391 = vsel %vm389, %v386, 0.0
          %v392 = vadd.f32 %v390, %v391
          %393 = vadd.xlane.f32.xlu0 %v392
          %v394 = vpop.xlane.xlu0 %393
          %v395 = vrot.slane %v394, 4
          %v396 = vadd.f32 %v394, %v395
          %v397 = vrot.slane %v396, 2
          %v398 = vadd.f32 %v396, %v397
          %v399 = vrot.slane %v398, 1
          %v400 = vadd.f32 %v398, %v399
          %s401 = vtos %v400
          %v402 = vstv %s401
          %vm403 = vcmask 0
          %404 = vst.msk [vmem:[%s217] sm:$0x1] %vm403, %v402
        $region44: #{tpu_custom_call.1} parent=27 // pred_fallthru
          _
        %p405 = scmp.lt.s32.totalorder %s23, 1
        %s406 = scalar_select %p405, %s23, 1
        %s407 = scalar_lea.vmem %s2, %s406
        // Predicated region
        $region45: #{tpu_custom_call.1} parent=27 // pred_check
          %p408 = pneg %p105
        $region46: #{tpu_custom_call.1} parent=27 // pred_check_branch
          %410 = sbr.rel (%p408) target = $region48
        $region47: #{tpu_custom_call.1} parent=27 // pred_region
          _
        $region48: #{tpu_custom_call.1} parent=27 // pred_fallthru
          _
      $region28: #{tpu_custom_call.1} parent=5 // pred_fallthru
        _
      %p411 = scmp.le.s32.totalorder 2, %s14
      // Predicated region
      $region49: #{tpu_custom_call.1} parent=5 // pred_check
        %p412 = pneg %p411
      $region50: #{tpu_custom_call.1} parent=5 // pred_check_branch
        %414 = sbr.rel (%p412) target = $region52
      $region51: #{tpu_custom_call.1} parent=5 // pred_region
        %s415 = ssub.s32 %s14, 2
        // Predicated region
        $region53: #{tpu_custom_call.1} parent=51 // pred_check
          %p416 = pneg %p111
        $region54: #{tpu_custom_call.1} parent=51 // pred_check_branch
          %418 = sbr.rel (%p416) target = $region56
        $region55: #{tpu_custom_call.1} parent=51 // pred_region
          %p419 = scmp.lt.s32.totalorder %s25, 1
          %s420 = scalar_select %p419, %s25, 1
          %s421 = scalar_lea.vmem %s2, %s420
        $region56: #{tpu_custom_call.1} parent=51 // pred_fallthru
          _
      $region52: #{tpu_custom_call.1} parent=5 // pred_fallthru
        _
    $region6: #{tpu_custom_call.1} parent=1 // loop_footer
      %s18 = sadd.s32 1, %s14
    $region7: #{tpu_custom_call.1} parent=1 // loop_footer_branch
      %13 = sbr.rel target = $region3
    $region8: #{tpu_custom_call.1} parent=1 // loop_exit
      _
    %422 = vsyncpa [#allocation4], 1
    %s423 = scalar_lea.sflag [#allocation4], 1
    %424 = vsyncpa %s423, 1
    %425 = vsyncpa [#allocation6], 1
    %s426 = scalar_lea.sflag [#allocation6], 1
    %427 = vsyncpa %s426, 1

</llo_original>
